<compile_context>
chip_gen: v7x
topology: tpu7x:2x2x1
jax: 0.10.0
libtpu: 0.0.40
codegen_flags: <defaults>
</compile_context>

<pallas_src>
import functools

import jax
import jax.numpy as jnp
from jax import lax
from jax.experimental import pallas as pl
from jax.experimental.pallas import tpu as pltpu


def upsample_conv_kernel(x_ref, w_ref, b_ref, o_ref, *, scale, padding):
    """Fused nearest-upsample + conv1d + bias + ReLU for one batch block.

    x_ref: (B, C_in, L)       raw input block (NCW; no upsample / pad applied)
    w_ref: (K*C_out, C_in)    flattened conv weight, w_ref[k*C_out + o, i] = w[o, i, k]
    b_ref: (C_out, 1)         conv bias (broadcasts over lanes)
    o_ref: (B, C_out, L_out)  output block (PyTorch NCW)
    """
    B, _, L = x_ref.shape
    C_out, L_out = o_ref.shape[1], o_ref.shape[2]
    rows = w_ref.shape[0]
    K = rows // C_out
    L_up = L * scale

    x = x_ref[...]                                                   # (B, C_in, L)
    # Fold the batch block onto the lane axis -> ONE wide MXU matmul.
    x2 = x[0] if B == 1 else jnp.concatenate([x[b] for b in range(B)], axis=-1)
    y = jnp.dot(w_ref[...], x2, preferred_element_type=jnp.float32)  # (K*C_out, B*L)

    # Nearest-neighbour upsample along lanes (XLU work; replaces dense A matmuls).
    y_up = jnp.repeat(y, scale, axis=-1) if scale > 1 else y         # (K*C_out, B*L_up)

    bias = b_ref[...]                                                # (C_out, 1)
    for b in range(B):                       # B and K are small & static -> unrolled
        yb = y_up[:, b * L_up:(b + 1) * L_up]                        # (K*C_out, L_up)
        if padding:
            zeros = jnp.zeros((rows, padding), jnp.float32)
            yb = jnp.concatenate([zeros, yb, zeros], axis=-1)        # conv zero-pad
        # Each conv tap is a static shifted lane-slice accumulated on the VPU.
        acc = yb[0:C_out, 0:L_out]
        for k in range(1, K):
            acc = acc + yb[k * C_out:(k + 1) * C_out, k:k + L_out]
        acc = jnp.maximum(acc + bias, 0.0)                           # f32 epilogue (v5e-safe)
        o_ref[b] = acc.astype(o_ref.dtype)


def _choose_batch_block(n, l):
    """Batch-block size B (must divide N).

    Prefer keeping >=2 grid steps (v7x has two TensorCores) and B*L >= 128
    lanes (full vregs / unmasked vector loads); among valid choices, target
    ~256-lane matmuls.
    """
    divisors = [b for b in range(1, n + 1) if n % b == 0]

    def key(b):
        lanes_ok = (b * l) >= 128
        multi_step = (n // b) >= 2 or n == 1
        return (lanes_ok and multi_step, multi_step, lanes_ok, -abs(b * l - 256))

    return max(divisors, key=key)


@functools.partial(jax.jit, static_argnames=("scale", "padding"))
def upsample_cnn_forward(x_ncw, weight, bias, *, scale, padding):
    """Forward pass matching UpsampleCNN.forward (upsample -> conv1d -> ReLU).

    x_ncw:  (N, C_in, L)        PyTorch NCW layout
    weight: (C_out, C_in, K)    PyTorch Conv1d weight layout
    bias:   (C_out,)
    Returns (N, C_out, L_out) with L_out = L*scale + 2*padding - K + 1.
    """
    N, C_in, L = x_ncw.shape
    C_out, _, K = weight.shape
    L_out = L * scale + 2 * padding - K + 1

    B = _choose_batch_block(N, L)

    # Flattened conv weight: w_vcat[k*C_out + o, i] = weight[o, i, k]
    w_vcat = jnp.transpose(weight, (2, 0, 1)).reshape(K * C_out, C_in).astype(x_ncw.dtype)
    b2 = bias.reshape(C_out, 1).astype(x_ncw.dtype)

    kernel = functools.partial(upsample_conv_kernel, scale=scale, padding=padding)

    out = pl.pallas_call(
        kernel,
        out_shape=jax.ShapeDtypeStruct((N, C_out, L_out), x_ncw.dtype),
        grid=(N // B,),
        in_specs=[
            pl.BlockSpec((B, C_in, L), lambda n: (n, 0, 0)),        # raw x (NCW)
            pl.BlockSpec((K * C_out, C_in), lambda n: (0, 0)),      # flattened weight
            pl.BlockSpec((C_out, 1), lambda n: (0, 0)),             # bias
        ],
        out_specs=pl.BlockSpec((B, C_out, L_out), lambda n: (n, 0, 0)),
        compiler_params=pltpu.CompilerParams(dimension_semantics=("parallel",)),
    )(x_ncw, w_vcat, b2)

    return out                                  # NCW: (N, C_out, L_out)


def _reference_forward(x_ncw, weight, bias, *, scale, padding):
    """Plain-JAX reference (upsample -> conv1d -> relu) for validation."""
    x_up = jnp.repeat(x_ncw, scale, axis=2)
    y = lax.conv_general_dilated(
        x_up, weight,
        window_strides=(1,),
        padding=[(padding, padding)],
        dimension_numbers=("NCH", "OIH", "NCH"),
    )
    y = y + bias[None, :, None]
    return jnp.maximum(y, 0.0)


if __name__ == "__main__":
    key = jax.random.PRNGKey(0)

    def init_params(k, c_in, c_out, ksize):
        kw, kb = jax.random.split(k)
        fan_in = c_in * ksize
        bound = 1.0 / (fan_in ** 0.5)
        w = jax.random.uniform(kw, (c_out, c_in, ksize), minval=-bound, maxval=bound,
                               dtype=jnp.float32)
        b = jax.random.uniform(kb, (c_out,), minval=-bound, maxval=bound,
                               dtype=jnp.float32)
        return w, b

    k0, k1, k2, k3 = jax.random.split(key, 4)

    # Config 1: module defaults (in=4, out=8, kernel=3, padding=1, scale=2),
    # batch=2, length=16.
    x1 = jax.random.normal(k0, (2, 4, 16), dtype=jnp.float32)
    w1, b1 = init_params(k1, 4, 8, 3)
    out1 = jax.block_until_ready(upsample_cnn_forward(x1, w1, b1, scale=2, padding=1))
    ref1 = _reference_forward(x1, w1, b1, scale=2, padding=1)
    assert out1.shape == ref1.shape == (2, 8, 32), out1.shape
    assert jnp.allclose(out1, ref1, atol=1e-5, rtol=1e-5), "config-1 mismatch vs reference"

    # Config 2: exercises the batched (B > 1) path and a non-'same' conv
    # (in=6, out=16, kernel=5, padding=1, scale=3), batch=8, length=16.
    x2 = jax.random.normal(k2, (8, 6, 16), dtype=jnp.float32)
    w2, b2 = init_params(k3, 6, 16, 5)
    out2 = jax.block_until_ready(upsample_cnn_forward(x2, w2, b2, scale=3, padding=1))
    ref2 = _reference_forward(x2, w2, b2, scale=3, padding=1)
    assert out2.shape == ref2.shape == (8, 16, 46), out2.shape
    assert jnp.allclose(out2, ref2, atol=1e-5, rtol=1e-5), "config-2 mismatch vs reference"

    print("KERNEL_OK")
</pallas_src>

<mosaic_0001>
module attributes {stable_mosaic.version = 11 : i64} {
  func.func @upsample_conv_kernel(%arg0: i32, %arg1: memref<1x4x16xf32, #tpu.memory_space<vmem>>, %arg2: memref<24x4xf32, #tpu.memory_space<vmem>>, %arg3: memref<8x1xf32, #tpu.memory_space<vmem>>, %arg4: memref<1x8x32xf32, #tpu.memory_space<vmem>>) attributes {dimension_semantics = [#tpu.dimension_semantics<parallel>], iteration_bounds = array<i64: 2>, scalar_prefetch = 0 : i64, scratch_operands = 0 : i64, tpu.core_type = #tpu.core_type<tc>, window_params = [{transform_indices = @transform_0, window_bounds = array<i64: 1, 4, 16>}, {pipeline_mode = #tpu.pipeline_mode<synchronous>, transform_indices = @transform_1, window_bounds = array<i64: 24, 4>}, {pipeline_mode = #tpu.pipeline_mode<synchronous>, transform_indices = @transform_2, window_bounds = array<i64: 8, 1>}, {transform_indices = @transform_3, window_bounds = array<i64: 1, 8, 32>}]} {
    %c0 = arith.constant 0 : index
    %c0_0 = arith.constant 0 : index
    %c0_1 = arith.constant 0 : index
    %0 = vector.load %arg1[%c0, %c0_0, %c0_1] : memref<1x4x16xf32, #tpu.memory_space<vmem>>, vector<1x4x16xf32>
    %1 = vector.shape_cast %0 : vector<1x4x16xf32> to vector<4x16xf32>
    %c0_2 = arith.constant 0 : index
    %c0_3 = arith.constant 0 : index
    %2 = vector.load %arg2[%c0_2, %c0_3] : memref<24x4xf32, #tpu.memory_space<vmem>>, vector<24x4xf32>
    %cst = arith.constant dense<0.000000e+00> : vector<24x16xf32>
    %3 = tpu.matmul %2, %1, %cst {dimension_numbers = #tpu.dot_dimension_numbers<[1], [0], [0], [1], [0, 0, 1, 1], [], []>} : vector<24x4xf32>, vector<4x16xf32>, vector<24x16xf32> -> vector<24x16xf32>
    %4 = vector.shape_cast %3 : vector<24x16xf32> to vector<24x16x1xf32>
    %5 = vector.broadcast %4 : vector<24x16x1xf32> to vector<24x16x2xf32>
    %6 = vector.shape_cast %5 : vector<24x16x2xf32> to vector<24x32xf32>
    %c0_4 = arith.constant 0 : index
    %c0_5 = arith.constant 0 : index
    %7 = vector.load %arg3[%c0_4, %c0_5] : memref<8x1xf32, #tpu.memory_space<vmem>>, vector<8x1xf32>
    %cst_6 = arith.constant 0.000000e+00 : f32
    %8 = vector.broadcast %cst_6 : f32 to vector<24x1xf32>
    %9 = tpu.concatenate %8, %6, %8 in 1 : vector<24x1xf32>, vector<24x32xf32>, vector<24x1xf32> -> vector<24x34xf32>
    %10 = vector.extract_strided_slice %9 {offsets = [0, 0], sizes = [8, 32], strides = [1, 1]} : vector<24x34xf32> to vector<8x32xf32>
    %11 = vector.extract_strided_slice %9 {offsets = [8, 1], sizes = [8, 32], strides = [1, 1]} : vector<24x34xf32> to vector<8x32xf32>
    %12 = arith.addf %10, %11 : vector<8x32xf32>
    %13 = vector.extract_strided_slice %9 {offsets = [16, 2], sizes = [8, 32], strides = [1, 1]} : vector<24x34xf32> to vector<8x32xf32>
    %14 = arith.addf %12, %13 : vector<8x32xf32>
    %15 = vector.broadcast %7 : vector<8x1xf32> to vector<8x32xf32>
    %16 = arith.addf %14, %15 : vector<8x32xf32>
    %cst_7 = arith.constant 0.000000e+00 : f32
    %17 = vector.broadcast %cst_7 : f32 to vector<8x32xf32>
    %18 = arith.maximumf %16, %17 : vector<8x32xf32>
    %c0_8 = arith.constant 0 : index
    %c0_9 = arith.constant 0 : index
    %c0_10 = arith.constant 0 : index
    %19 = vector.load %arg4[%c0_8, %c0_9, %c0_10] : memref<1x8x32xf32, #tpu.memory_space<vmem>>, vector<1x8x32xf32>
    %20 = vector.shape_cast %19 : vector<1x8x32xf32> to vector<8x32xf32>
    %21 = vector.shape_cast %18 : vector<8x32xf32> to vector<1x8x32xf32>
    tpu.vector_store %arg4[%c0_8, %c0_9, %c0_10], %21 {strides = array<i32>} : memref<1x8x32xf32, #tpu.memory_space<vmem>>, vector<1x8x32xf32>,
    return
  }
  func.func @transform_0(%arg0: i32) -> (i32, i32, i32) {
    %c0_i32 = arith.constant 0 : i32
    %c0_i32_0 = arith.constant 0 : i32
    %c0_i32_1 = arith.constant 0 : i32
    return %arg0, %c0_i32, %c0_i32_0 : i32, i32, i32
  }
  func.func @transform_1(%arg0: i32) -> (i32, i32) {
    %c0_i32 = arith.constant 0 : i32
    %c0_i32_0 = arith.constant 0 : i32
    %c0_i32_1 = arith.constant 0 : i32
    return %c0_i32, %c0_i32_0 : i32, i32
  }
  func.func @transform_2(%arg0: i32) -> (i32, i32) {
    %c0_i32 = arith.constant 0 : i32
    %c0_i32_0 = arith.constant 0 : i32
    %c0_i32_1 = arith.constant 0 : i32
    return %c0_i32, %c0_i32_0 : i32, i32
  }
  func.func @transform_3(%arg0: i32) -> (i32, i32, i32) {
    %c0_i32 = arith.constant 0 : i32
    %c0_i32_0 = arith.constant 0 : i32
    %c0_i32_1 = arith.constant 0 : i32
    return %arg0, %c0_i32, %c0_i32_0 : i32, i32, i32
  }
}

</mosaic_0001>

<llo_original>
// kernel: upsample_cnn_forward.1
$region0: #{upsample_cnn_forward.1}
  #allocation0 [shape = 'u32[]', space=smem, size = 0x4, offset = 0x4, fixed_abs, tag = 'smem constant byte address 0x4 - core index']
  #allocation1 [shape = 'u32[144,128]{1,0:T(1,128)}', space=vmem, size = 0x12000, scoped, tag = 'internal scratch']
  %s0 = inlined_call_operand.vmem [shape: f32[2,4,16], index: 0, kind: input, shape index: {}]
  %s1 = inlined_call_operand.vmem [shape: f32[24,4], index: 1, kind: input, shape index: {}]
  %s2 = inlined_call_operand.vmem [shape: f32[8,1], index: 2, kind: input, shape index: {}]
  %s3 = inlined_call_operand.hbm [shape: f32[2,8,32], index: 3, kind: output, shape index: {}]
  %s4 = sld [smem:[#allocation0]]
  $region45: #{upsample_cnn_forward.1} parent=0
    _
  %s6 = ssub.s32 1, %s4
  %s7 = scalar_select 0, %s6, %s4
  $region1: #{upsample_cnn_forward.1} parent=0
    #allocation2 [shape = 'u8[8192]{0}', space=vmem, size = 0x2000, scoped, tag = 'output window, operand 0']
    #allocation3 [shape = 's32[2]{0}', space=sflag, size = 0x8, scoped, tag = 'scoped memory for upsample_cnn_forward.1']
    %8 = vsyncpa [#allocation3], 0
    %s9 = scalar_lea.sflag [#allocation3], 1
    %10 = vsyncpa %s9, 0
    loop: start=0, step=1, limit=4
    $region2: #{upsample_cnn_forward.1} parent=1 // loop_pre_header
      _
    $region3: #{upsample_cnn_forward.1} parent=1 // loop_header
      %s12 = sphi 0, %s16
      %p13 = scmp.ge.s32.totalorder %s12, 4
      %s22 = sphi 0, %s24
      %s25 = sphi 0, %s22
      %s26 = sphi 0, %s25
      %s42 = sphi 0, %s26
      %s46 = sphi 0, %s46
      %s48 = sphi 0, %s46
      %s49 = sphi 0, %s48
      %s63 = sphi 0, %s49
      %s67 = sphi 0, %s67
      %s69 = sphi 0, %s67
      %s70 = sphi 0, %s69
      %s84 = sphi 0, %s70
      %s90 = sphi 0, %s92
      %s93 = sphi 0, %s90
      %s94 = sphi 0, %s93
      %s110 = sphi 0, %s94
    $region4: #{upsample_cnn_forward.1} parent=1 // loop_header_branch
      %15 = sbr.rel (%p13) target = $region8
    $region5: #{upsample_cnn_forward.1} parent=1 // loop_body
      %s17 = ssub.s32 %s12, 1
      %s18 = ssub.s32 %s12, 2
      %s19 = sadd.s32 %s12, 1
      %s20 = ssub.s32 %s12, %s19
      %p21 = scmp.eq.s32.totalorder %s20, 0
      %s23 = sadd.s32 %s22, 1
      %s24 = scalar_select %p21, %s22, %s23
      %p27 = pneg %p21
      %p28 = scmp.eq.s32.totalorder %s12, 1
      %p29 = por %p27, %p28
      %p30 = scmp.ne.s32.totalorder %s22, %s25
      %p31 = scmp.eq.s32.totalorder %s12, 0
      %p32 = por %p30, %p31
      %p33 = scmp.ne.s32.totalorder %s22, %s25
      %p34 = scmp.eq.s32.totalorder %s17, 1
      %p35 = por %p33, %p34
      %p36 = scmp.ne.s32.totalorder %s25, %s26
      %p37 = scmp.eq.s32.totalorder %s17, 0
      %p38 = por %p36, %p37
      %p39 = scmp.ne.s32.totalorder %s25, %s26
      %p40 = scmp.eq.s32.totalorder %s18, 1
      %p41 = por %p39, %p40
      %p43 = scmp.ne.s32.totalorder %s26, %s42
      %p44 = scmp.eq.s32.totalorder %s18, 0
      %p45 = por %p43, %p44
      %s47 = sadd.s32 %s46, 1
      %p50 = scmp.eq.s32.totalorder %s12, 1
      %p51 = scmp.ne.s32.totalorder %s46, %s48
      %p52 = scmp.eq.s32.totalorder %s12, 0
      %p53 = por %p51, %p52
      %p54 = scmp.ne.s32.totalorder %s46, %s48
      %p55 = scmp.eq.s32.totalorder %s17, 1
      %p56 = por %p54, %p55
      %p57 = scmp.ne.s32.totalorder %s48, %s49
      %p58 = scmp.eq.s32.totalorder %s17, 0
      %p59 = por %p57, %p58
      %p60 = scmp.ne.s32.totalorder %s48, %s49
      %p61 = scmp.eq.s32.totalorder %s18, 1
      %p62 = por %p60, %p61
      %p64 = scmp.ne.s32.totalorder %s49, %s63
      %p65 = scmp.eq.s32.totalorder %s18, 0
      %p66 = por %p64, %p65
      %s68 = sadd.s32 %s67, 1
      %p71 = scmp.eq.s32.totalorder %s12, 1
      %p72 = scmp.ne.s32.totalorder %s67, %s69
      %p73 = scmp.eq.s32.totalorder %s12, 0
      %p74 = por %p72, %p73
      %p75 = scmp.ne.s32.totalorder %s67, %s69
      %p76 = scmp.eq.s32.totalorder %s17, 1
      %p77 = por %p75, %p76
      %p78 = scmp.ne.s32.totalorder %s69, %s70
      %p79 = scmp.eq.s32.totalorder %s17, 0
      %p80 = por %p78, %p79
      %p81 = scmp.ne.s32.totalorder %s69, %s70
      %p82 = scmp.eq.s32.totalorder %s18, 1
      %p83 = por %p81, %p82
      %p85 = scmp.ne.s32.totalorder %s70, %s84
      %p86 = scmp.eq.s32.totalorder %s18, 0
      %p87 = por %p85, %p86
      %s88 = ssub.s32 %s12, %s19
      %p89 = scmp.eq.s32.totalorder %s88, 0
      %s91 = sadd.s32 %s90, 1
      %s92 = scalar_select %p89, %s90, %s91
      %p95 = pneg %p89
      %p96 = scmp.eq.s32.totalorder %s12, 1
      %p97 = por %p95, %p96
      %p98 = scmp.ne.s32.totalorder %s90, %s93
      %p99 = scmp.eq.s32.totalorder %s12, 0
      %p100 = por %p98, %p99
      %p101 = scmp.ne.s32.totalorder %s90, %s93
      %p102 = scmp.eq.s32.totalorder %s17, 1
      %p103 = por %p101, %p102
      %p104 = scmp.ne.s32.totalorder %s93, %s94
      %p105 = scmp.eq.s32.totalorder %s17, 0
      %p106 = por %p104, %p105
      %p107 = scmp.ne.s32.totalorder %s93, %s94
      %p108 = scmp.eq.s32.totalorder %s18, 1
      %p109 = por %p107, %p108
      %p111 = scmp.ne.s32.totalorder %s94, %s110
      %p112 = scmp.eq.s32.totalorder %s18, 0
      %p113 = por %p111, %p112
      %p114 = scmp.le.s32.totalorder 1, %s12
      %p115 = scmp.lt.s32.totalorder %s12, 3
      %p116 = pnand %p114, %p115
      %p117 = pneg %p116
      // Predicated region
      $region9: #{upsample_cnn_forward.1} parent=5 // pred_check
        _
      $region10: #{upsample_cnn_forward.1} parent=5 // pred_check_branch
        %119 = sbr.rel (%p116) target = $region12
      $region11: #{upsample_cnn_forward.1} parent=5 // pred_region
        %s120 = ssub.s32 %s12, 1
        // Predicated region
        $region13: #{upsample_cnn_forward.1} parent=11 // pred_check
          %p121 = pneg %p59
        $region14: #{upsample_cnn_forward.1} parent=11 // pred_check_branch
          %123 = sbr.rel (%p121) target = $region16
        $region15: #{upsample_cnn_forward.1} parent=11 // pred_region
          _
        $region16: #{upsample_cnn_forward.1} parent=11 // pred_fallthru
          _
        // Predicated region
        $region17: #{upsample_cnn_forward.1} parent=11 // pred_check
          %p124 = pneg %p80
        $region18: #{upsample_cnn_forward.1} parent=11 // pred_check_branch
          %126 = sbr.rel (%p124) target = $region20
        $region19: #{upsample_cnn_forward.1} parent=11 // pred_region
          _
        $region20: #{upsample_cnn_forward.1} parent=11 // pred_fallthru
          _
      $region12: #{upsample_cnn_forward.1} parent=5 // pred_fallthru
        _
      %p127 = scmp.lt.s32.totalorder %s12, 2
      // Predicated region
      $region21: #{upsample_cnn_forward.1} parent=5 // pred_check
        %p128 = pneg %p127
      $region22: #{upsample_cnn_forward.1} parent=5 // pred_check_branch
        %130 = sbr.rel (%p128) target = $region24
      $region23: #{upsample_cnn_forward.1} parent=5 // pred_region
        // Predicated region
        $region25: #{upsample_cnn_forward.1} parent=23 // pred_check
          %p131 = pneg %p32
        $region26: #{upsample_cnn_forward.1} parent=23 // pred_check_branch
          %133 = sbr.rel (%p131) target = $region28
        $region27: #{upsample_cnn_forward.1} parent=23 // pred_region
          %p134 = scmp.lt.s32.totalorder %s12, 1
          %s135 = scalar_select %p134, %s12, 1
          %s136 = smul.addr %s135, 4
          %s137 = scalar_lea.vmem %s0, %s136
        $region28: #{upsample_cnn_forward.1} parent=23 // pred_fallthru
          _
      $region24: #{upsample_cnn_forward.1} parent=5 // pred_fallthru
        _
      %p138 = scmp.le.s32.totalorder 1, %s12
      %p139 = scmp.lt.s32.totalorder %s12, 3
      %p140 = pnand %p138, %p139
      %p141 = pneg %p140
      // Predicated region
      $region29: #{upsample_cnn_forward.1} parent=5 // pred_check
        _
      $region30: #{upsample_cnn_forward.1} parent=5 // pred_check_branch
        %143 = sbr.rel (%p140) target = $region32
      $region31: #{upsample_cnn_forward.1} parent=5 // pred_region
        %s144 = ssub.s32 %s12, 1
        %p145 = scmp.lt.s32.totalorder %s17, 1
        %s146 = scalar_select %p145, %s17, 1
        %s147 = smul.addr %s146, 4
        %s148 = scalar_lea.vmem %s0, %s147
        %p149 = pneg %p38
        %p150 = pneg %p35
        %p151 = pneg %p59
        %p152 = pneg %p56
        %p153 = pneg %p80
        %p154 = pneg %p77
        %p155 = pneg %p106
        %p156 = pneg %p103
        %s157 = sand.u32 %s93, 1
        %s158 = scalar_lea.sflag [#allocation3], %s157
        %s159 = sand.u32 %s93, 1
        %s160 = smul.addr %s159, 8
        %s161 = scalar_lea.vmem [#allocation2], %s160
        %p162 = scmp.lt.s32.totalorder %s17, 1
        %s163 = scalar_select %p162, %s17, 1
        %s164 = smul.addr %s163, 4
        %s165 = scalar_lea.vmem %s0, %s164
        %v166 = vld [vmem:[%s165] sm:$0xf]
        %v167 = vld [vmem:[%s1] sm:$0xff]
        %v168 = vld [vmem:[%s1 + $0x8] sm:$0xff]
        %v169 = vld [vmem:[%s1 + $0x10] sm:$0xff]
        %vm170 = vcmask 31744
        %v172 = vsel %vm170, %v167, 0
        %v175 = vsel %vm170, %v168, 0
        %v178 = vsel %vm170, %v169, 0
        %vm180 = vcmask 1043456
        %v182 = vsel %vm180, %v166, 0
        %184 = vmatprep.subr.mxu0 0.0
        %185 = vmatpush1.msra.mxu0 %v182
        %186 = vmatprep.subr.mxu0 0.0
        %187 = vmatpush1.msra.mxu0 0.0
        %188 = vmatprep.subr.mxu0 0.0
        %189 = vmatpush1.msra.mxu0 0.0
        %190 = vmatprep.subr.mxu0 0.0
        %191 = vmatpush1.msra.mxu0 0.0
        %192 = vmatprep.subr.mxu0 0.0
        %193 = vmatpush1.msra.mxu0 0.0
        %194 = vmatprep.subr.mxu0 0.0
        %195 = vmatpush1.msra.mxu0 0.0
        %196 = vmatprep.subr.mxu0 0.0
        %197 = vmatpush1.msra.mxu0 0.0
        %198 = vmatprep.subr.mxu0 0.0
        %199 = vmatpush1.msra.mxu0 0.0
        %200 = vmatprep.subr.mxu0 0.0
        %201 = vmatpush1.msra.mxu0 0.0
        %202 = vmatprep.subr.mxu0 0.0
        %203 = vmatpush1.msra.mxu0 0.0
        %204 = vmatprep.subr.mxu0 0.0
        %205 = vmatpush1.msra.mxu0 0.0
        %206 = vmatprep.subr.mxu0 0.0
        %207 = vmatpush1.msra.mxu0 0.0
        %208 = vmatprep.subr.mxu0 0.0
        %209 = vmatpush1.msra.mxu0 0.0
        %210 = vmatprep.subr.mxu0 0.0
        %211 = vmatpush1.msra.mxu0 0.0
        %212 = vmatprep.subr.mxu0 0.0
        %213 = vmatpush1.msra.mxu0 0.0
        %214 = vmatprep.subr.mxu0 0.0
        %215 = vmatpush1.msra.mxu0 0.0
        %216 = vmatprep.subr.mxu0 0.0
        %217 = vmatpush1.msra.mxu0 0.0
        %218 = vmatprep.subr.mxu0 0.0
        %219 = vmatpush1.msra.mxu0 0.0
        %220 = vmatprep.subr.mxu0 0.0
        %221 = vmatpush1.msra.mxu0 0.0
        %222 = vmatprep.subr.mxu0 0.0
        %223 = vmatpush1.msra.mxu0 0.0
        %224 = vmatprep.subr.mxu0 0.0
        %225 = vmatpush1.msra.mxu0 0.0
        %226 = vmatprep.subr.mxu0 0.0
        %227 = vmatpush1.msra.mxu0 0.0
        %228 = vmatprep.subr.mxu0 0.0
        %229 = vmatpush1.msra.mxu0 0.0
        %230 = vmatprep.subr.mxu0 0.0
        %231 = vmatpush1.msra.mxu0 0.0
        %232 = vmatprep.subr.mxu0 0.0
        %233 = vmatpush1.msra.mxu0 0.0
        %234 = vmatprep.subr.mxu0 0.0
        %235 = vmatpush1.msra.mxu0 0.0
        %236 = vmatprep.subr.mxu0 0.0
        %237 = vmatpush1.msra.mxu0 0.0
        %238 = vmatprep.subr.mxu0 0.0
        %239 = vmatpush1.msra.mxu0 0.0
        %240 = vmatprep.subr.mxu0 0.0
        %241 = vmatpush1.msra.mxu0 0.0
        %242 = vmatprep.subr.mxu0 0.0
        %243 = vmatpush1.msra.mxu0 0.0
        %244 = vmatprep.subr.mxu0 0.0
        %245 = vmatpush1.msra.mxu0 0.0
        %246 = vmatprep.subr.mxu0 0.0
        %247 = vmatpush1.msra.mxu0 0.0
        %248 = vmatprep.mubr.f32.mxu0 0.0
        %249 = vmatmul.mubr.f32.gmra.mrb[0].mxu0 %v172
        %v250 = vpop.f32.mrb[0].mxu0
        %v251 = vadd.f32 0.0, %v250
        %v252 = vpop.f32.mrb[0].mxu0
        %253 = vmatprep.mubr.f32.mxu0 0.0
        %254 = vmatmul.mubr.f32.gmra.mrb[0].mxu0 %v175
        %v255 = vpop.f32.mrb[0].mxu0
        %v256 = vadd.f32 0.0, %v255
        %v257 = vpop.f32.mrb[0].mxu0
        %258 = vmatprep.mubr.f32.mxu0 0.0
        %259 = vmatmul.mubr.f32.gmra.mrb[0].mxu0 %v178
        %v260 = vpop.f32.mrb[0].mxu0
        %v261 = vadd.f32 0.0, %v260
        %v262 = vpop.f32.mrb[0].mxu0
        %263 = vdwg.mxu0
        %v264 = vlaneseq
        %v265 = vshrl.u32 %v264, 7
        %v266 = vsub.s32 0, %v265
        %v267 = vrot.slane %v251, %v266
        %269 = vbcast.lane.b32.xlu0 %v267, 256
        %v270 = vpop.permute.xlu0 %269
        %s272 = sor.u32 256, 8
        %273 = vbcast.lane.b32.xlu0 %v267, %s272
        %v274 = vpop.permute.xlu0 %273
        %v275 = vlaneseq
        %v276 = vshrl.u32 %v275, 7
        %v277 = vsub.s32 1, %v276
        %v278 = vrot.slane %v251, %v277
        %280 = vbcast.lane.b32.xlu0 %v278, 256
        %v281 = vpop.permute.xlu0 %280
        %s283 = sor.u32 256, 8
        %284 = vbcast.lane.b32.xlu0 %v278, %s283
        %v285 = vpop.permute.xlu0 %284
        %v286 = vlaneseq
        %v287 = vshrl.u32 %v286, 7
        %v288 = vsub.s32 2, %v287
        %v289 = vrot.slane %v251, %v288
        %291 = vbcast.lane.b32.xlu0 %v289, 256
        %v292 = vpop.permute.xlu0 %291
        %s294 = sor.u32 256, 8
        %295 = vbcast.lane.b32.xlu0 %v289, %s294
        %v296 = vpop.permute.xlu0 %295
        %v297 = vlaneseq
        %v298 = vshrl.u32 %v297, 7
        %v299 = vsub.s32 3, %v298
        %v300 = vrot.slane %v251, %v299
        %302 = vbcast.lane.b32.xlu0 %v300, 256
        %v303 = vpop.permute.xlu0 %302
        %s305 = sor.u32 256, 8
        %306 = vbcast.lane.b32.xlu0 %v300, %s305
        %v307 = vpop.permute.xlu0 %306
        %v308 = vlaneseq
        %v309 = vshrl.u32 %v308, 7
        %v310 = vsub.s32 4, %v309
        %v311 = vrot.slane %v251, %v310
        %313 = vbcast.lane.b32.xlu0 %v311, 256
        %v314 = vpop.permute.xlu0 %313
        %s316 = sor.u32 256, 8
        %317 = vbcast.lane.b32.xlu0 %v311, %s316
        %v318 = vpop.permute.xlu0 %317
        %v319 = vlaneseq
        %v320 = vshrl.u32 %v319, 7
        %v321 = vsub.s32 5, %v320
        %v322 = vrot.slane %v251, %v321
        %324 = vbcast.lane.b32.xlu0 %v322, 256
        %v325 = vpop.permute.xlu0 %324
        %s327 = sor.u32 256, 8
        %328 = vbcast.lane.b32.xlu0 %v322, %s327
        %v329 = vpop.permute.xlu0 %328
        %v330 = vlaneseq
        %v331 = vshrl.u32 %v330, 7
        %v332 = vsub.s32 6, %v331
        %v333 = vrot.slane %v251, %v332
        %335 = vbcast.lane.b32.xlu0 %v333, 256
        %v336 = vpop.permute.xlu0 %335
        %s338 = sor.u32 256, 8
        %339 = vbcast.lane.b32.xlu0 %v333, %s338
        %v340 = vpop.permute.xlu0 %339
        %v341 = vlaneseq
        %v342 = vshrl.u32 %v341, 7
        %v343 = vsub.s32 7, %v342
        %v344 = vrot.slane %v251, %v343
        %346 = vbcast.lane.b32.xlu0 %v344, 256
        %v347 = vpop.permute.xlu0 %346
        %s349 = sor.u32 256, 8
        %350 = vbcast.lane.b32.xlu0 %v344, %s349
        %v351 = vpop.permute.xlu0 %350
        %v352 = vlaneseq
        %v353 = vshrl.u32 %v352, 7
        %v354 = vsub.s32 0, %v353
        %v355 = vrot.slane %v256, %v354
        %357 = vbcast.lane.b32.xlu0 %v355, 256
        %v358 = vpop.permute.xlu0 %357
        %s360 = sor.u32 256, 8
        %361 = vbcast.lane.b32.xlu0 %v355, %s360
        %v362 = vpop.permute.xlu0 %361
        %v363 = vlaneseq
        %v364 = vshrl.u32 %v363, 7
        %v365 = vsub.s32 1, %v364
        %v366 = vrot.slane %v256, %v365
        %368 = vbcast.lane.b32.xlu0 %v366, 256
        %v369 = vpop.permute.xlu0 %368
        %s371 = sor.u32 256, 8
        %372 = vbcast.lane.b32.xlu0 %v366, %s371
        %v373 = vpop.permute.xlu0 %372
        %v374 = vlaneseq
        %v375 = vshrl.u32 %v374, 7
        %v376 = vsub.s32 2, %v375
        %v377 = vrot.slane %v256, %v376
        %379 = vbcast.lane.b32.xlu0 %v377, 256
        %v380 = vpop.permute.xlu0 %379
        %s382 = sor.u32 256, 8
        %383 = vbcast.lane.b32.xlu0 %v377, %s382
        %v384 = vpop.permute.xlu0 %383
        %v385 = vlaneseq
        %v386 = vshrl.u32 %v385, 7
        %v387 = vsub.s32 3, %v386
        %v388 = vrot.slane %v256, %v387
        %390 = vbcast.lane.b32.xlu0 %v388, 256
        %v391 = vpop.permute.xlu0 %390
        %s393 = sor.u32 256, 8
        %394 = vbcast.lane.b32.xlu0 %v388, %s393
        %v395 = vpop.permute.xlu0 %394
        %v396 = vlaneseq
        %v397 = vshrl.u32 %v396, 7
        %v398 = vsub.s32 4, %v397
        %v399 = vrot.slane %v256, %v398
        %401 = vbcast.lane.b32.xlu0 %v399, 256
        %v402 = vpop.permute.xlu0 %401
        %s404 = sor.u32 256, 8
        %405 = vbcast.lane.b32.xlu0 %v399, %s404
        %v406 = vpop.permute.xlu0 %405
        %v407 = vlaneseq
        %v408 = vshrl.u32 %v407, 7
        %v409 = vsub.s32 5, %v408
        %v410 = vrot.slane %v256, %v409
        %412 = vbcast.lane.b32.xlu0 %v410, 256
        %v413 = vpop.permute.xlu0 %412
        %s415 = sor.u32 256, 8
        %416 = vbcast.lane.b32.xlu0 %v410, %s415
        %v417 = vpop.permute.xlu0 %416
        %v418 = vlaneseq
        %v419 = vshrl.u32 %v418, 7
        %v420 = vsub.s32 6, %v419
        %v421 = vrot.slane %v256, %v420
        %423 = vbcast.lane.b32.xlu0 %v421, 256
        %v424 = vpop.permute.xlu0 %423
        %s426 = sor.u32 256, 8
        %427 = vbcast.lane.b32.xlu0 %v421, %s426
        %v428 = vpop.permute.xlu0 %427
        %v429 = vlaneseq
        %v430 = vshrl.u32 %v429, 7
        %v431 = vsub.s32 7, %v430
        %v432 = vrot.slane %v256, %v431
        %434 = vbcast.lane.b32.xlu0 %v432, 256
        %v435 = vpop.permute.xlu0 %434
        %s437 = sor.u32 256, 8
        %438 = vbcast.lane.b32.xlu0 %v432, %s437
        %v439 = vpop.permute.xlu0 %438
        %v440 = vlaneseq
        %v441 = vshrl.u32 %v440, 7
        %v442 = vsub.s32 0, %v441
        %v443 = vrot.slane %v261, %v442
        %445 = vbcast.lane.b32.xlu0 %v443, 256
        %v446 = vpop.permute.xlu0 %445
        %s448 = sor.u32 256, 8
        %449 = vbcast.lane.b32.xlu0 %v443, %s448
        %v450 = vpop.permute.xlu0 %449
        %v451 = vlaneseq
        %v452 = vshrl.u32 %v451, 7
        %v453 = vsub.s32 1, %v452
        %v454 = vrot.slane %v261, %v453
        %456 = vbcast.lane.b32.xlu0 %v454, 256
        %v457 = vpop.permute.xlu0 %456
        %s459 = sor.u32 256, 8
        %460 = vbcast.lane.b32.xlu0 %v454, %s459
        %v461 = vpop.permute.xlu0 %460
        %v462 = vlaneseq
        %v463 = vshrl.u32 %v462, 7
        %v464 = vsub.s32 2, %v463
        %v465 = vrot.slane %v261, %v464
        %467 = vbcast.lane.b32.xlu0 %v465, 256
        %v468 = vpop.permute.xlu0 %467
        %s470 = sor.u32 256, 8
        %471 = vbcast.lane.b32.xlu0 %v465, %s470
        %v472 = vpop.permute.xlu0 %471
        %v473 = vlaneseq
        %v474 = vshrl.u32 %v473, 7
        %v475 = vsub.s32 3, %v474
        %v476 = vrot.slane %v261, %v475
        %478 = vbcast.lane.b32.xlu0 %v476, 256
        %v479 = vpop.permute.xlu0 %478
        %s481 = sor.u32 256, 8
        %482 = vbcast.lane.b32.xlu0 %v476, %s481
        %v483 = vpop.permute.xlu0 %482
        %v484 = vlaneseq
        %v485 = vshrl.u32 %v484, 7
        %v486 = vsub.s32 4, %v485
        %v487 = vrot.slane %v261, %v486
        %489 = vbcast.lane.b32.xlu0 %v487, 256
        %v490 = vpop.permute.xlu0 %489
        %s492 = sor.u32 256, 8
        %493 = vbcast.lane.b32.xlu0 %v487, %s492
        %v494 = vpop.permute.xlu0 %493
        %v495 = vlaneseq
        %v496 = vshrl.u32 %v495, 7
        %v497 = vsub.s32 5, %v496
        %v498 = vrot.slane %v261, %v497
        %500 = vbcast.lane.b32.xlu0 %v498, 256
        %v501 = vpop.permute.xlu0 %500
        %s503 = sor.u32 256, 8
        %504 = vbcast.lane.b32.xlu0 %v498, %s503
        %v505 = vpop.permute.xlu0 %504
        %v506 = vlaneseq
        %v507 = vshrl.u32 %v506, 7
        %v508 = vsub.s32 6, %v507
        %v509 = vrot.slane %v261, %v508
        %511 = vbcast.lane.b32.xlu0 %v509, 256
        %v512 = vpop.permute.xlu0 %511
        %s514 = sor.u32 256, 8
        %515 = vbcast.lane.b32.xlu0 %v509, %s514
        %v516 = vpop.permute.xlu0 %515
        %v517 = vlaneseq
        %v518 = vshrl.u32 %v517, 7
        %v519 = vsub.s32 7, %v518
        %v520 = vrot.slane %v261, %v519
        %522 = vbcast.lane.b32.xlu0 %v520, 256
        %v523 = vpop.permute.xlu0 %522
        %s525 = sor.u32 256, 8
        %526 = vbcast.lane.b32.xlu0 %v520, %s525
        %v527 = vpop.permute.xlu0 %526
        %v528 = vcombine.low %v270, %v292
        %v529 = vcombine.high %v270, %v292
        %v531 = vunpack.c.l.s4 1983009808
        %v532 = vunpack.c.0.s8 %v531
        %v533 = vlaneseq
        %v534 = vshrl.u32 %v533, 7
        %v535 = vsub.s32 %v532, %v534
        %v536 = vrot.slane %v528, %v535
        %v538 = vunpack.c.l.s4 1983009808
        %v539 = vunpack.c.0.s8 %v538
        %v540 = vlaneseq
        %v541 = vshrl.u32 %v540, 7
        %v542 = vsub.s32 %v539, %v541
        %v543 = vrot.slane %v529, %v542
        %v544 = vcombine.low %v281, %v303
        %v545 = vcombine.high %v281, %v303
        %v547 = vunpack.c.l.s4 1983009808
        %v548 = vunpack.c.0.s8 %v547
        %v549 = vlaneseq
        %v550 = vshrl.u32 %v549, 7
        %v551 = vsub.s32 %v548, %v550
        %v552 = vrot.slane %v544, %v551
        %v554 = vunpack.c.l.s4 1983009808
        %v555 = vunpack.c.0.s8 %v554
        %v556 = vlaneseq
        %v557 = vshrl.u32 %v556, 7
        %v558 = vsub.s32 %v555, %v557
        %v559 = vrot.slane %v545, %v558
        %v560 = vcombine.low %v314, %v336
        %v561 = vcombine.high %v314, %v336
        %v563 = vunpack.c.l.s4 1983009808
        %v564 = vunpack.c.0.s8 %v563
        %v565 = vlaneseq
        %v566 = vshrl.u32 %v565, 7
        %v567 = vsub.s32 %v564, %v566
        %v568 = vrot.slane %v560, %v567
        %v570 = vunpack.c.l.s4 1983009808
        %v571 = vunpack.c.0.s8 %v570
        %v572 = vlaneseq
        %v573 = vshrl.u32 %v572, 7
        %v574 = vsub.s32 %v571, %v573
        %v575 = vrot.slane %v561, %v574
        %v576 = vcombine.low %v325, %v347
        %v577 = vcombine.high %v325, %v347
        %v579 = vunpack.c.l.s4 1983009808
        %v580 = vunpack.c.0.s8 %v579
        %v581 = vlaneseq
        %v582 = vshrl.u32 %v581, 7
        %v583 = vsub.s32 %v580, %v582
        %v584 = vrot.slane %v576, %v583
        %v586 = vunpack.c.l.s4 1983009808
        %v587 = vunpack.c.0.s8 %v586
        %v588 = vlaneseq
        %v589 = vshrl.u32 %v588, 7
        %v590 = vsub.s32 %v587, %v589
        %v591 = vrot.slane %v577, %v590
        %v592 = vcombine.low %v536, %v552
        %v593 = vcombine.high %v536, %v552
        %v595 = vunpack.c.l.s4 1934713408
        %v596 = vunpack.c.0.s8 %v595
        %v597 = vlaneseq
        %v598 = vshrl.u32 %v597, 7
        %v599 = vsub.s32 %v596, %v598
        %v600 = vrot.slane %v592, %v599
        %v602 = vunpack.c.l.s4 1934713408
        %v603 = vunpack.c.0.s8 %v602
        %v604 = vlaneseq
        %v605 = vshrl.u32 %v604, 7
        %v606 = vsub.s32 %v603, %v605
        %v607 = vrot.slane %v593, %v606
        %v608 = vcombine.low %v543, %v559
        %v609 = vcombine.high %v543, %v559
        %v611 = vunpack.c.l.s4 1934713408
        %v612 = vunpack.c.0.s8 %v611
        %v613 = vlaneseq
        %v614 = vshrl.u32 %v613, 7
        %v615 = vsub.s32 %v612, %v614
        %v616 = vrot.slane %v608, %v615
        %v618 = vunpack.c.l.s4 1934713408
        %v619 = vunpack.c.0.s8 %v618
        %v620 = vlaneseq
        %v621 = vshrl.u32 %v620, 7
        %v622 = vsub.s32 %v619, %v621
        %v623 = vrot.slane %v609, %v622
        %v624 = vcombine.low %v568, %v584
        %v625 = vcombine.high %v568, %v584
        %v627 = vunpack.c.l.s4 1934713408
        %v628 = vunpack.c.0.s8 %v627
        %v629 = vlaneseq
        %v630 = vshrl.u32 %v629, 7
        %v631 = vsub.s32 %v628, %v630
        %v632 = vrot.slane %v624, %v631
        %v634 = vunpack.c.l.s4 1934713408
        %v635 = vunpack.c.0.s8 %v634
        %v636 = vlaneseq
        %v637 = vshrl.u32 %v636, 7
        %v638 = vsub.s32 %v635, %v637
        %v639 = vrot.slane %v625, %v638
        %v640 = vcombine.low %v575, %v591
        %v641 = vcombine.high %v575, %v591
        %v643 = vunpack.c.l.s4 1934713408
        %v644 = vunpack.c.0.s8 %v643
        %v645 = vlaneseq
        %v646 = vshrl.u32 %v645, 7
        %v647 = vsub.s32 %v644, %v646
        %v648 = vrot.slane %v640, %v647
        %v650 = vunpack.c.l.s4 1934713408
        %v651 = vunpack.c.0.s8 %v650
        %v652 = vlaneseq
        %v653 = vshrl.u32 %v652, 7
        %v654 = vsub.s32 %v651, %v653
        %v655 = vrot.slane %v641, %v654
        %v656 = vcombine.low %v600, %v632
        %v657 = vcombine.high %v600, %v632
        %v658 = vcombine.low %v607, %v639
        %v659 = vcombine.high %v607, %v639
        %v660 = vcombine.low %v616, %v648
        %v661 = vcombine.high %v616, %v648
        %v662 = vcombine.low %v623, %v655
        %v663 = vcombine.high %v623, %v655
        %v664 = vcombine.low %v358, %v380
        %v665 = vcombine.high %v358, %v380
        %v667 = vunpack.c.l.s4 1983009808
        %v668 = vunpack.c.0.s8 %v667
        %v669 = vlaneseq
        %v670 = vshrl.u32 %v669, 7
        %v671 = vsub.s32 %v668, %v670
        %v672 = vrot.slane %v664, %v671
        %v674 = vunpack.c.l.s4 1983009808
        %v675 = vunpack.c.0.s8 %v674
        %v676 = vlaneseq
        %v677 = vshrl.u32 %v676, 7
        %v678 = vsub.s32 %v675, %v677
        %v679 = vrot.slane %v665, %v678
        %v680 = vcombine.low %v369, %v391
        %v681 = vcombine.high %v369, %v391
        %v683 = vunpack.c.l.s4 1983009808
        %v684 = vunpack.c.0.s8 %v683
        %v685 = vlaneseq
        %v686 = vshrl.u32 %v685, 7
        %v687 = vsub.s32 %v684, %v686
        %v688 = vrot.slane %v680, %v687
        %v690 = vunpack.c.l.s4 1983009808
        %v691 = vunpack.c.0.s8 %v690
        %v692 = vlaneseq
        %v693 = vshrl.u32 %v692, 7
        %v694 = vsub.s32 %v691, %v693
        %v695 = vrot.slane %v681, %v694
        %v696 = vcombine.low %v402, %v424
        %v697 = vcombine.high %v402, %v424
        %v699 = vunpack.c.l.s4 1983009808
        %v700 = vunpack.c.0.s8 %v699
        %v701 = vlaneseq
        %v702 = vshrl.u32 %v701, 7
        %v703 = vsub.s32 %v700, %v702
        %v704 = vrot.slane %v696, %v703
        %v706 = vunpack.c.l.s4 1983009808
        %v707 = vunpack.c.0.s8 %v706
        %v708 = vlaneseq
        %v709 = vshrl.u32 %v708, 7
        %v710 = vsub.s32 %v707, %v709
        %v711 = vrot.slane %v697, %v710
        %v712 = vcombine.low %v413, %v435
        %v713 = vcombine.high %v413, %v435
        %v715 = vunpack.c.l.s4 1983009808
        %v716 = vunpack.c.0.s8 %v715
        %v717 = vlaneseq
        %v718 = vshrl.u32 %v717, 7
        %v719 = vsub.s32 %v716, %v718
        %v720 = vrot.slane %v712, %v719
        %v722 = vunpack.c.l.s4 1983009808
        %v723 = vunpack.c.0.s8 %v722
        %v724 = vlaneseq
        %v725 = vshrl.u32 %v724, 7
        %v726 = vsub.s32 %v723, %v725
        %v727 = vrot.slane %v713, %v726
        %v728 = vcombine.low %v672, %v688
        %v729 = vcombine.high %v672, %v688
        %v731 = vunpack.c.l.s4 1934713408
        %v732 = vunpack.c.0.s8 %v731
        %v733 = vlaneseq
        %v734 = vshrl.u32 %v733, 7
        %v735 = vsub.s32 %v732, %v734
        %v736 = vrot.slane %v728, %v735
        %v738 = vunpack.c.l.s4 1934713408
        %v739 = vunpack.c.0.s8 %v738
        %v740 = vlaneseq
        %v741 = vshrl.u32 %v740, 7
        %v742 = vsub.s32 %v739, %v741
        %v743 = vrot.slane %v729, %v742
        %v744 = vcombine.low %v679, %v695
        %v745 = vcombine.high %v679, %v695
        %v747 = vunpack.c.l.s4 1934713408
        %v748 = vunpack.c.0.s8 %v747
        %v749 = vlaneseq
        %v750 = vshrl.u32 %v749, 7
        %v751 = vsub.s32 %v748, %v750
        %v752 = vrot.slane %v744, %v751
        %v754 = vunpack.c.l.s4 1934713408
        %v755 = vunpack.c.0.s8 %v754
        %v756 = vlaneseq
        %v757 = vshrl.u32 %v756, 7
        %v758 = vsub.s32 %v755, %v757
        %v759 = vrot.slane %v745, %v758
        %v760 = vcombine.low %v704, %v720
        %v761 = vcombine.high %v704, %v720
        %v763 = vunpack.c.l.s4 1934713408
        %v764 = vunpack.c.0.s8 %v763
        %v765 = vlaneseq
        %v766 = vshrl.u32 %v765, 7
        %v767 = vsub.s32 %v764, %v766
        %v768 = vrot.slane %v760, %v767
        %v770 = vunpack.c.l.s4 1934713408
        %v771 = vunpack.c.0.s8 %v770
        %v772 = vlaneseq
        %v773 = vshrl.u32 %v772, 7
        %v774 = vsub.s32 %v771, %v773
        %v775 = vrot.slane %v761, %v774
        %v776 = vcombine.low %v711, %v727
        %v777 = vcombine.high %v711, %v727
        %v779 = vunpack.c.l.s4 1934713408
        %v780 = vunpack.c.0.s8 %v779
        %v781 = vlaneseq
        %v782 = vshrl.u32 %v781, 7
        %v783 = vsub.s32 %v780, %v782
        %v784 = vrot.slane %v776, %v783
        %v786 = vunpack.c.l.s4 1934713408
        %v787 = vunpack.c.0.s8 %v786
        %v788 = vlaneseq
        %v789 = vshrl.u32 %v788, 7
        %v790 = vsub.s32 %v787, %v789
        %v791 = vrot.slane %v777, %v790
        %v792 = vcombine.low %v736, %v768
        %v793 = vcombine.high %v736, %v768
        %v794 = vcombine.low %v743, %v775
        %v795 = vcombine.high %v743, %v775
        %v796 = vcombine.low %v752, %v784
        %v797 = vcombine.high %v752, %v784
        %v798 = vcombine.low %v759, %v791
        %v799 = vcombine.high %v759, %v791
        %v800 = vcombine.low %v446, %v468
        %v801 = vcombine.high %v446, %v468
        %v803 = vunpack.c.l.s4 1983009808
        %v804 = vunpack.c.0.s8 %v803
        %v805 = vlaneseq
        %v806 = vshrl.u32 %v805, 7
        %v807 = vsub.s32 %v804, %v806
        %v808 = vrot.slane %v800, %v807
        %v810 = vunpack.c.l.s4 1983009808
        %v811 = vunpack.c.0.s8 %v810
        %v812 = vlaneseq
        %v813 = vshrl.u32 %v812, 7
        %v814 = vsub.s32 %v811, %v813
        %v815 = vrot.slane %v801, %v814
        %v816 = vcombine.low %v457, %v479
        %v817 = vcombine.high %v457, %v479
        %v819 = vunpack.c.l.s4 1983009808
        %v820 = vunpack.c.0.s8 %v819
        %v821 = vlaneseq
        %v822 = vshrl.u32 %v821, 7
        %v823 = vsub.s32 %v820, %v822
        %v824 = vrot.slane %v816, %v823
        %v826 = vunpack.c.l.s4 1983009808
        %v827 = vunpack.c.0.s8 %v826
        %v828 = vlaneseq
        %v829 = vshrl.u32 %v828, 7
        %v830 = vsub.s32 %v827, %v829
        %v831 = vrot.slane %v817, %v830
        %v832 = vcombine.low %v490, %v512
        %v833 = vcombine.high %v490, %v512
        %v835 = vunpack.c.l.s4 1983009808
        %v836 = vunpack.c.0.s8 %v835
        %v837 = vlaneseq
        %v838 = vshrl.u32 %v837, 7
        %v839 = vsub.s32 %v836, %v838
        %v840 = vrot.slane %v832, %v839
        %v842 = vunpack.c.l.s4 1983009808
        %v843 = vunpack.c.0.s8 %v842
        %v844 = vlaneseq
        %v845 = vshrl.u32 %v844, 7
        %v846 = vsub.s32 %v843, %v845
        %v847 = vrot.slane %v833, %v846
        %v848 = vcombine.low %v501, %v523
        %v849 = vcombine.high %v501, %v523
        %v851 = vunpack.c.l.s4 1983009808
        %v852 = vunpack.c.0.s8 %v851
        %v853 = vlaneseq
        %v854 = vshrl.u32 %v853, 7
        %v855 = vsub.s32 %v852, %v854
        %v856 = vrot.slane %v848, %v855
        %v858 = vunpack.c.l.s4 1983009808
        %v859 = vunpack.c.0.s8 %v858
        %v860 = vlaneseq
        %v861 = vshrl.u32 %v860, 7
        %v862 = vsub.s32 %v859, %v861
        %v863 = vrot.slane %v849, %v862
        %v864 = vcombine.low %v808, %v824
        %v865 = vcombine.high %v808, %v824
        %v867 = vunpack.c.l.s4 1934713408
        %v868 = vunpack.c.0.s8 %v867
        %v869 = vlaneseq
        %v870 = vshrl.u32 %v869, 7
        %v871 = vsub.s32 %v868, %v870
        %v872 = vrot.slane %v864, %v871
        %v874 = vunpack.c.l.s4 1934713408
        %v875 = vunpack.c.0.s8 %v874
        %v876 = vlaneseq
        %v877 = vshrl.u32 %v876, 7
        %v878 = vsub.s32 %v875, %v877
        %v879 = vrot.slane %v865, %v878
        %v880 = vcombine.low %v815, %v831
        %v881 = vcombine.high %v815, %v831
        %v883 = vunpack.c.l.s4 1934713408
        %v884 = vunpack.c.0.s8 %v883
        %v885 = vlaneseq
        %v886 = vshrl.u32 %v885, 7
        %v887 = vsub.s32 %v884, %v886
        %v888 = vrot.slane %v880, %v887
        %v890 = vunpack.c.l.s4 1934713408
        %v891 = vunpack.c.0.s8 %v890
        %v892 = vlaneseq
        %v893 = vshrl.u32 %v892, 7
        %v894 = vsub.s32 %v891, %v893
        %v895 = vrot.slane %v881, %v894
        %v896 = vcombine.low %v840, %v856
        %v897 = vcombine.high %v840, %v856
        %v899 = vunpack.c.l.s4 1934713408
        %v900 = vunpack.c.0.s8 %v899
        %v901 = vlaneseq
        %v902 = vshrl.u32 %v901, 7
        %v903 = vsub.s32 %v900, %v902
        %v904 = vrot.slane %v896, %v903
        %v906 = vunpack.c.l.s4 1934713408
        %v907 = vunpack.c.0.s8 %v906
        %v908 = vlaneseq
        %v909 = vshrl.u32 %v908, 7
        %v910 = vsub.s32 %v907, %v909
        %v911 = vrot.slane %v897, %v910
        %v912 = vcombine.low %v847, %v863
        %v913 = vcombine.high %v847, %v863
        %v915 = vunpack.c.l.s4 1934713408
        %v916 = vunpack.c.0.s8 %v915
        %v917 = vlaneseq
        %v918 = vshrl.u32 %v917, 7
        %v919 = vsub.s32 %v916, %v918
        %v920 = vrot.slane %v912, %v919
        %v922 = vunpack.c.l.s4 1934713408
        %v923 = vunpack.c.0.s8 %v922
        %v924 = vlaneseq
        %v925 = vshrl.u32 %v924, 7
        %v926 = vsub.s32 %v923, %v925
        %v927 = vrot.slane %v913, %v926
        %v928 = vcombine.low %v872, %v904
        %v929 = vcombine.high %v872, %v904
        %v930 = vcombine.low %v879, %v911
        %v931 = vcombine.high %v879, %v911
        %v932 = vcombine.low %v888, %v920
        %v933 = vcombine.high %v888, %v920
        %v934 = vcombine.low %v895, %v927
        %v935 = vcombine.high %v895, %v927
        %v936 = vcombine.low %v274, %v296
        %v937 = vcombine.high %v274, %v296
        %v939 = vunpack.c.l.s4 1983009808
        %v940 = vunpack.c.0.s8 %v939
        %v941 = vlaneseq
        %v942 = vshrl.u32 %v941, 7
        %v943 = vsub.s32 %v940, %v942
        %v944 = vrot.slane %v936, %v943
        %v946 = vunpack.c.l.s4 1983009808
        %v947 = vunpack.c.0.s8 %v946
        %v948 = vlaneseq
        %v949 = vshrl.u32 %v948, 7
        %v950 = vsub.s32 %v947, %v949
        %v951 = vrot.slane %v937, %v950
        %v952 = vcombine.low %v285, %v307
        %v953 = vcombine.high %v285, %v307
        %v955 = vunpack.c.l.s4 1983009808
        %v956 = vunpack.c.0.s8 %v955
        %v957 = vlaneseq
        %v958 = vshrl.u32 %v957, 7
        %v959 = vsub.s32 %v956, %v958
        %v960 = vrot.slane %v952, %v959
        %v962 = vunpack.c.l.s4 1983009808
        %v963 = vunpack.c.0.s8 %v962
        %v964 = vlaneseq
        %v965 = vshrl.u32 %v964, 7
        %v966 = vsub.s32 %v963, %v965
        %v967 = vrot.slane %v953, %v966
        %v968 = vcombine.low %v318, %v340
        %v969 = vcombine.high %v318, %v340
        %v971 = vunpack.c.l.s4 1983009808
        %v972 = vunpack.c.0.s8 %v971
        %v973 = vlaneseq
        %v974 = vshrl.u32 %v973, 7
        %v975 = vsub.s32 %v972, %v974
        %v976 = vrot.slane %v968, %v975
        %v978 = vunpack.c.l.s4 1983009808
        %v979 = vunpack.c.0.s8 %v978
        %v980 = vlaneseq
        %v981 = vshrl.u32 %v980, 7
        %v982 = vsub.s32 %v979, %v981
        %v983 = vrot.slane %v969, %v982
        %v984 = vcombine.low %v329, %v351
        %v985 = vcombine.high %v329, %v351
        %v987 = vunpack.c.l.s4 1983009808
        %v988 = vunpack.c.0.s8 %v987
        %v989 = vlaneseq
        %v990 = vshrl.u32 %v989, 7
        %v991 = vsub.s32 %v988, %v990
        %v992 = vrot.slane %v984, %v991
        %v994 = vunpack.c.l.s4 1983009808
        %v995 = vunpack.c.0.s8 %v994
        %v996 = vlaneseq
        %v997 = vshrl.u32 %v996, 7
        %v998 = vsub.s32 %v995, %v997
        %v999 = vrot.slane %v985, %v998
        %v1000 = vcombine.low %v944, %v960
        %v1001 = vcombine.high %v944, %v960
        %v1003 = vunpack.c.l.s4 1934713408
        %v1004 = vunpack.c.0.s8 %v1003
        %v1005 = vlaneseq
        %v1006 = vshrl.u32 %v1005, 7
        %v1007 = vsub.s32 %v1004, %v1006
        %v1008 = vrot.slane %v1000, %v1007
        %v1010 = vunpack.c.l.s4 1934713408
        %v1011 = vunpack.c.0.s8 %v1010
        %v1012 = vlaneseq
        %v1013 = vshrl.u32 %v1012, 7
        %v1014 = vsub.s32 %v1011, %v1013
        %v1015 = vrot.slane %v1001, %v1014
        %v1016 = vcombine.low %v951, %v967
        %v1017 = vcombine.high %v951, %v967
        %v1019 = vunpack.c.l.s4 1934713408
        %v1020 = vunpack.c.0.s8 %v1019
        %v1021 = vlaneseq
        %v1022 = vshrl.u32 %v1021, 7
        %v1023 = vsub.s32 %v1020, %v1022
        %v1024 = vrot.slane %v1016, %v1023
        %v1026 = vunpack.c.l.s4 1934713408
        %v1027 = vunpack.c.0.s8 %v1026
        %v1028 = vlaneseq
        %v1029 = vshrl.u32 %v1028, 7
        %v1030 = vsub.s32 %v1027, %v1029
        %v1031 = vrot.slane %v1017, %v1030
        %v1032 = vcombine.low %v976, %v992
        %v1033 = vcombine.high %v976, %v992
        %v1035 = vunpack.c.l.s4 1934713408
        %v1036 = vunpack.c.0.s8 %v1035
        %v1037 = vlaneseq
        %v1038 = vshrl.u32 %v1037, 7
        %v1039 = vsub.s32 %v1036, %v1038
        %v1040 = vrot.slane %v1032, %v1039
        %v1042 = vunpack.c.l.s4 1934713408
        %v1043 = vunpack.c.0.s8 %v1042
        %v1044 = vlaneseq
        %v1045 = vshrl.u32 %v1044, 7
        %v1046 = vsub.s32 %v1043, %v1045
        %v1047 = vrot.slane %v1033, %v1046
        %v1048 = vcombine.low %v983, %v999
        %v1049 = vcombine.high %v983, %v999
        %v1051 = vunpack.c.l.s4 1934713408
        %v1052 = vunpack.c.0.s8 %v1051
        %v1053 = vlaneseq
        %v1054 = vshrl.u32 %v1053, 7
        %v1055 = vsub.s32 %v1052, %v1054
        %v1056 = vrot.slane %v1048, %v1055
        %v1058 = vunpack.c.l.s4 1934713408
        %v1059 = vunpack.c.0.s8 %v1058
        %v1060 = vlaneseq
        %v1061 = vshrl.u32 %v1060, 7
        %v1062 = vsub.s32 %v1059, %v1061
        %v1063 = vrot.slane %v1049, %v1062
        %v1064 = vcombine.low %v1008, %v1040
        %v1065 = vcombine.high %v1008, %v1040
        %v1066 = vcombine.low %v1015, %v1047
        %v1067 = vcombine.high %v1015, %v1047
        %v1068 = vcombine.low %v1024, %v1056
        %v1069 = vcombine.high %v1024, %v1056
        %v1070 = vcombine.low %v1031, %v1063
        %v1071 = vcombine.high %v1031, %v1063
        %v1072 = vcombine.low %v362, %v384
        %v1073 = vcombine.high %v362, %v384
        %v1075 = vunpack.c.l.s4 1983009808
        %v1076 = vunpack.c.0.s8 %v1075
        %v1077 = vlaneseq
        %v1078 = vshrl.u32 %v1077, 7
        %v1079 = vsub.s32 %v1076, %v1078
        %v1080 = vrot.slane %v1072, %v1079
        %v1082 = vunpack.c.l.s4 1983009808
        %v1083 = vunpack.c.0.s8 %v1082
        %v1084 = vlaneseq
        %v1085 = vshrl.u32 %v1084, 7
        %v1086 = vsub.s32 %v1083, %v1085
        %v1087 = vrot.slane %v1073, %v1086
        %v1088 = vcombine.low %v373, %v395
        %v1089 = vcombine.high %v373, %v395
        %v1091 = vunpack.c.l.s4 1983009808
        %v1092 = vunpack.c.0.s8 %v1091
        %v1093 = vlaneseq
        %v1094 = vshrl.u32 %v1093, 7
        %v1095 = vsub.s32 %v1092, %v1094
        %v1096 = vrot.slane %v1088, %v1095
        %v1098 = vunpack.c.l.s4 1983009808
        %v1099 = vunpack.c.0.s8 %v1098
        %v1100 = vlaneseq
        %v1101 = vshrl.u32 %v1100, 7
        %v1102 = vsub.s32 %v1099, %v1101
        %v1103 = vrot.slane %v1089, %v1102
        %v1104 = vcombine.low %v406, %v428
        %v1105 = vcombine.high %v406, %v428
        %v1107 = vunpack.c.l.s4 1983009808
        %v1108 = vunpack.c.0.s8 %v1107
        %v1109 = vlaneseq
        %v1110 = vshrl.u32 %v1109, 7
        %v1111 = vsub.s32 %v1108, %v1110
        %v1112 = vrot.slane %v1104, %v1111
        %v1114 = vunpack.c.l.s4 1983009808
        %v1115 = vunpack.c.0.s8 %v1114
        %v1116 = vlaneseq
        %v1117 = vshrl.u32 %v1116, 7
        %v1118 = vsub.s32 %v1115, %v1117
        %v1119 = vrot.slane %v1105, %v1118
        %v1120 = vcombine.low %v417, %v439
        %v1121 = vcombine.high %v417, %v439
        %v1123 = vunpack.c.l.s4 1983009808
        %v1124 = vunpack.c.0.s8 %v1123
        %v1125 = vlaneseq
        %v1126 = vshrl.u32 %v1125, 7
        %v1127 = vsub.s32 %v1124, %v1126
        %v1128 = vrot.slane %v1120, %v1127
        %v1130 = vunpack.c.l.s4 1983009808
        %v1131 = vunpack.c.0.s8 %v1130
        %v1132 = vlaneseq
        %v1133 = vshrl.u32 %v1132, 7
        %v1134 = vsub.s32 %v1131, %v1133
        %v1135 = vrot.slane %v1121, %v1134
        %v1136 = vcombine.low %v1080, %v1096
        %v1137 = vcombine.high %v1080, %v1096
        %v1139 = vunpack.c.l.s4 1934713408
        %v1140 = vunpack.c.0.s8 %v1139
        %v1141 = vlaneseq
        %v1142 = vshrl.u32 %v1141, 7
        %v1143 = vsub.s32 %v1140, %v1142
        %v1144 = vrot.slane %v1136, %v1143
        %v1146 = vunpack.c.l.s4 1934713408
        %v1147 = vunpack.c.0.s8 %v1146
        %v1148 = vlaneseq
        %v1149 = vshrl.u32 %v1148, 7
        %v1150 = vsub.s32 %v1147, %v1149
        %v1151 = vrot.slane %v1137, %v1150
        %v1152 = vcombine.low %v1087, %v1103
        %v1153 = vcombine.high %v1087, %v1103
        %v1155 = vunpack.c.l.s4 1934713408
        %v1156 = vunpack.c.0.s8 %v1155
        %v1157 = vlaneseq
        %v1158 = vshrl.u32 %v1157, 7
        %v1159 = vsub.s32 %v1156, %v1158
        %v1160 = vrot.slane %v1152, %v1159
        %v1162 = vunpack.c.l.s4 1934713408
        %v1163 = vunpack.c.0.s8 %v1162
        %v1164 = vlaneseq
        %v1165 = vshrl.u32 %v1164, 7
        %v1166 = vsub.s32 %v1163, %v1165
        %v1167 = vrot.slane %v1153, %v1166
        %v1168 = vcombine.low %v1112, %v1128
        %v1169 = vcombine.high %v1112, %v1128
        %v1171 = vunpack.c.l.s4 1934713408
        %v1172 = vunpack.c.0.s8 %v1171
        %v1173 = vlaneseq
        %v1174 = vshrl.u32 %v1173, 7
        %v1175 = vsub.s32 %v1172, %v1174
        %v1176 = vrot.slane %v1168, %v1175
        %v1178 = vunpack.c.l.s4 1934713408
        %v1179 = vunpack.c.0.s8 %v1178
        %v1180 = vlaneseq
        %v1181 = vshrl.u32 %v1180, 7
        %v1182 = vsub.s32 %v1179, %v1181
        %v1183 = vrot.slane %v1169, %v1182
        %v1184 = vcombine.low %v1119, %v1135
        %v1185 = vcombine.high %v1119, %v1135
        %v1187 = vunpack.c.l.s4 1934713408
        %v1188 = vunpack.c.0.s8 %v1187
        %v1189 = vlaneseq
        %v1190 = vshrl.u32 %v1189, 7
        %v1191 = vsub.s32 %v1188, %v1190
        %v1192 = vrot.slane %v1184, %v1191
        %v1194 = vunpack.c.l.s4 1934713408
        %v1195 = vunpack.c.0.s8 %v1194
        %v1196 = vlaneseq
        %v1197 = vshrl.u32 %v1196, 7
        %v1198 = vsub.s32 %v1195, %v1197
        %v1199 = vrot.slane %v1185, %v1198
        %v1200 = vcombine.low %v1144, %v1176
        %v1201 = vcombine.high %v1144, %v1176
        %v1202 = vcombine.low %v1151, %v1183
        %v1203 = vcombine.high %v1151, %v1183
        %v1204 = vcombine.low %v1160, %v1192
        %v1205 = vcombine.high %v1160, %v1192
        %v1206 = vcombine.low %v1167, %v1199
        %v1207 = vcombine.high %v1167, %v1199
        %v1208 = vcombine.low %v450, %v472
        %v1209 = vcombine.high %v450, %v472
        %v1211 = vunpack.c.l.s4 1983009808
        %v1212 = vunpack.c.0.s8 %v1211
        %v1213 = vlaneseq
        %v1214 = vshrl.u32 %v1213, 7
        %v1215 = vsub.s32 %v1212, %v1214
        %v1216 = vrot.slane %v1208, %v1215
        %v1218 = vunpack.c.l.s4 1983009808
        %v1219 = vunpack.c.0.s8 %v1218
        %v1220 = vlaneseq
        %v1221 = vshrl.u32 %v1220, 7
        %v1222 = vsub.s32 %v1219, %v1221
        %v1223 = vrot.slane %v1209, %v1222
        %v1224 = vcombine.low %v461, %v483
        %v1225 = vcombine.high %v461, %v483
        %v1227 = vunpack.c.l.s4 1983009808
        %v1228 = vunpack.c.0.s8 %v1227
        %v1229 = vlaneseq
        %v1230 = vshrl.u32 %v1229, 7
        %v1231 = vsub.s32 %v1228, %v1230
        %v1232 = vrot.slane %v1224, %v1231
        %v1234 = vunpack.c.l.s4 1983009808
        %v1235 = vunpack.c.0.s8 %v1234
        %v1236 = vlaneseq
        %v1237 = vshrl.u32 %v1236, 7
        %v1238 = vsub.s32 %v1235, %v1237
        %v1239 = vrot.slane %v1225, %v1238
        %v1240 = vcombine.low %v494, %v516
        %v1241 = vcombine.high %v494, %v516
        %v1243 = vunpack.c.l.s4 1983009808
        %v1244 = vunpack.c.0.s8 %v1243
        %v1245 = vlaneseq
        %v1246 = vshrl.u32 %v1245, 7
        %v1247 = vsub.s32 %v1244, %v1246
        %v1248 = vrot.slane %v1240, %v1247
        %v1250 = vunpack.c.l.s4 1983009808
        %v1251 = vunpack.c.0.s8 %v1250
        %v1252 = vlaneseq
        %v1253 = vshrl.u32 %v1252, 7
        %v1254 = vsub.s32 %v1251, %v1253
        %v1255 = vrot.slane %v1241, %v1254
        %v1256 = vcombine.low %v505, %v527
        %v1257 = vcombine.high %v505, %v527
        %v1259 = vunpack.c.l.s4 1983009808
        %v1260 = vunpack.c.0.s8 %v1259
        %v1261 = vlaneseq
        %v1262 = vshrl.u32 %v1261, 7
        %v1263 = vsub.s32 %v1260, %v1262
        %v1264 = vrot.slane %v1256, %v1263
        %v1266 = vunpack.c.l.s4 1983009808
        %v1267 = vunpack.c.0.s8 %v1266
        %v1268 = vlaneseq
        %v1269 = vshrl.u32 %v1268, 7
        %v1270 = vsub.s32 %v1267, %v1269
        %v1271 = vrot.slane %v1257, %v1270
        %v1272 = vcombine.low %v1216, %v1232
        %v1273 = vcombine.high %v1216, %v1232
        %v1275 = vunpack.c.l.s4 1934713408
        %v1276 = vunpack.c.0.s8 %v1275
        %v1277 = vlaneseq
        %v1278 = vshrl.u32 %v1277, 7
        %v1279 = vsub.s32 %v1276, %v1278
        %v1280 = vrot.slane %v1272, %v1279
        %v1282 = vunpack.c.l.s4 1934713408
        %v1283 = vunpack.c.0.s8 %v1282
        %v1284 = vlaneseq
        %v1285 = vshrl.u32 %v1284, 7
        %v1286 = vsub.s32 %v1283, %v1285
        %v1287 = vrot.slane %v1273, %v1286
        %v1288 = vcombine.low %v1223, %v1239
        %v1289 = vcombine.high %v1223, %v1239
        %v1291 = vunpack.c.l.s4 1934713408
        %v1292 = vunpack.c.0.s8 %v1291
        %v1293 = vlaneseq
        %v1294 = vshrl.u32 %v1293, 7
        %v1295 = vsub.s32 %v1292, %v1294
        %v1296 = vrot.slane %v1288, %v1295
        %v1298 = vunpack.c.l.s4 1934713408
        %v1299 = vunpack.c.0.s8 %v1298
        %v1300 = vlaneseq
        %v1301 = vshrl.u32 %v1300, 7
        %v1302 = vsub.s32 %v1299, %v1301
        %v1303 = vrot.slane %v1289, %v1302
        %v1304 = vcombine.low %v1248, %v1264
        %v1305 = vcombine.high %v1248, %v1264
        %v1307 = vunpack.c.l.s4 1934713408
        %v1308 = vunpack.c.0.s8 %v1307
        %v1309 = vlaneseq
        %v1310 = vshrl.u32 %v1309, 7
        %v1311 = vsub.s32 %v1308, %v1310
        %v1312 = vrot.slane %v1304, %v1311
        %v1314 = vunpack.c.l.s4 1934713408
        %v1315 = vunpack.c.0.s8 %v1314
        %v1316 = vlaneseq
        %v1317 = vshrl.u32 %v1316, 7
        %v1318 = vsub.s32 %v1315, %v1317
        %v1319 = vrot.slane %v1305, %v1318
        %v1320 = vcombine.low %v1255, %v1271
        %v1321 = vcombine.high %v1255, %v1271
        %v1323 = vunpack.c.l.s4 1934713408
        %v1324 = vunpack.c.0.s8 %v1323
        %v1325 = vlaneseq
        %v1326 = vshrl.u32 %v1325, 7
        %v1327 = vsub.s32 %v1324, %v1326
        %v1328 = vrot.slane %v1320, %v1327
        %v1330 = vunpack.c.l.s4 1934713408
        %v1331 = vunpack.c.0.s8 %v1330
        %v1332 = vlaneseq
        %v1333 = vshrl.u32 %v1332, 7
        %v1334 = vsub.s32 %v1331, %v1333
        %v1335 = vrot.slane %v1321, %v1334
        %v1336 = vcombine.low %v1280, %v1312
        %v1337 = vcombine.high %v1280, %v1312
        %v1338 = vcombine.low %v1287, %v1319
        %v1339 = vcombine.high %v1287, %v1319
        %v1340 = vcombine.low %v1296, %v1328
        %v1341 = vcombine.high %v1296, %v1328
        %v1342 = vcombine.low %v1303, %v1335
        %v1343 = vcombine.high %v1303, %v1335
        %1347 = vrot.lane.b32.xlu0 %v657, 2
        %v1348 = vpop.permute.xlu0 %1347
        %1349 = vrot.lane.b32.xlu0 %v793, 2
        %v1350 = vpop.permute.xlu0 %1349
        %1351 = vrot.lane.b32.xlu0 %v929, 2
        %v1352 = vpop.permute.xlu0 %1351
        %1359 = vrot.lane.b32.xlu0 %v658, 4
        %v1360 = vpop.permute.xlu0 %1359
        %1361 = vrot.lane.b32.xlu0 %v794, 4
        %v1362 = vpop.permute.xlu0 %1361
        %1363 = vrot.lane.b32.xlu0 %v930, 4
        %v1364 = vpop.permute.xlu0 %1363
        %1371 = vrot.lane.b32.xlu0 %v659, 6
        %v1372 = vpop.permute.xlu0 %1371
        %1373 = vrot.lane.b32.xlu0 %v795, 6
        %v1374 = vpop.permute.xlu0 %1373
        %1375 = vrot.lane.b32.xlu0 %v931, 6
        %v1376 = vpop.permute.xlu0 %1375
        %1383 = vrot.lane.b32.xlu0 %v660, 8
        %v1384 = vpop.permute.xlu0 %1383
        %1385 = vrot.lane.b32.xlu0 %v796, 8
        %v1386 = vpop.permute.xlu0 %1385
        %1387 = vrot.lane.b32.xlu0 %v932, 8
        %v1388 = vpop.permute.xlu0 %1387
        %1395 = vrot.lane.b32.xlu0 %v661, 10
        %v1396 = vpop.permute.xlu0 %1395
        %1397 = vrot.lane.b32.xlu0 %v797, 10
        %v1398 = vpop.permute.xlu0 %1397
        %1399 = vrot.lane.b32.xlu0 %v933, 10
        %v1400 = vpop.permute.xlu0 %1399
        %1407 = vrot.lane.b32.xlu0 %v662, 12
        %v1408 = vpop.permute.xlu0 %1407
        %1409 = vrot.lane.b32.xlu0 %v798, 12
        %v1410 = vpop.permute.xlu0 %1409
        %1411 = vrot.lane.b32.xlu0 %v934, 12
        %v1412 = vpop.permute.xlu0 %1411
        %1419 = vrot.lane.b32.xlu0 %v663, 14
        %v1420 = vpop.permute.xlu0 %1419
        %1421 = vrot.lane.b32.xlu0 %v799, 14
        %v1422 = vpop.permute.xlu0 %1421
        %1423 = vrot.lane.b32.xlu0 %v935, 14
        %v1424 = vpop.permute.xlu0 %1423
        %1431 = vrot.lane.b32.xlu0 %v1064, 16
        %v1432 = vpop.permute.xlu0 %1431
        %1433 = vrot.lane.b32.xlu0 %v1200, 16
        %v1434 = vpop.permute.xlu0 %1433
        %1435 = vrot.lane.b32.xlu0 %v1336, 16
        %v1436 = vpop.permute.xlu0 %1435
        %1443 = vrot.lane.b32.xlu0 %v1065, 18
        %v1444 = vpop.permute.xlu0 %1443
        %1445 = vrot.lane.b32.xlu0 %v1201, 18
        %v1446 = vpop.permute.xlu0 %1445
        %1447 = vrot.lane.b32.xlu0 %v1337, 18
        %v1448 = vpop.permute.xlu0 %1447
        %1455 = vrot.lane.b32.xlu0 %v1066, 20
        %v1456 = vpop.permute.xlu0 %1455
        %1457 = vrot.lane.b32.xlu0 %v1202, 20
        %v1458 = vpop.permute.xlu0 %1457
        %1459 = vrot.lane.b32.xlu0 %v1338, 20
        %v1460 = vpop.permute.xlu0 %1459
        %1467 = vrot.lane.b32.xlu0 %v1067, 22
        %v1468 = vpop.permute.xlu0 %1467
        %1469 = vrot.lane.b32.xlu0 %v1203, 22
        %v1470 = vpop.permute.xlu0 %1469
        %1471 = vrot.lane.b32.xlu0 %v1339, 22
        %v1472 = vpop.permute.xlu0 %1471
        %1479 = vrot.lane.b32.xlu0 %v1068, 24
        %v1480 = vpop.permute.xlu0 %1479
        %1481 = vrot.lane.b32.xlu0 %v1204, 24
        %v1482 = vpop.permute.xlu0 %1481
        %1483 = vrot.lane.b32.xlu0 %v1340, 24
        %v1484 = vpop.permute.xlu0 %1483
        %1491 = vrot.lane.b32.xlu0 %v1069, 26
        %v1492 = vpop.permute.xlu0 %1491
        %1493 = vrot.lane.b32.xlu0 %v1205, 26
        %v1494 = vpop.permute.xlu0 %1493
        %1495 = vrot.lane.b32.xlu0 %v1341, 26
        %v1496 = vpop.permute.xlu0 %1495
        %1503 = vrot.lane.b32.xlu0 %v1070, 28
        %v1504 = vpop.permute.xlu0 %1503
        %1505 = vrot.lane.b32.xlu0 %v1206, 28
        %v1506 = vpop.permute.xlu0 %1505
        %1507 = vrot.lane.b32.xlu0 %v1342, 28
        %v1508 = vpop.permute.xlu0 %1507
        %1515 = vrot.lane.b32.xlu0 %v1071, 30
        %v1516 = vpop.permute.xlu0 %1515
        %1517 = vrot.lane.b32.xlu0 %v1207, 30
        %v1518 = vpop.permute.xlu0 %1517
        %1519 = vrot.lane.b32.xlu0 %v1343, 30
        %v1520 = vpop.permute.xlu0 %1519
        %vm1524 = vcmask 15360
        %v1525 = vsel %vm1524, %v656, %v1348
        %v1526 = vsel %vm1524, %v792, %v1350
        %v1527 = vsel %vm1524, %v928, %v1352
        %v1528 = vsel %vm170, %v1525, %v1360
        %v1529 = vsel %vm170, %v1526, %v1362
        %v1530 = vsel %vm170, %v1527, %v1364
        %vm1531 = vcmask 48128
        %v1532 = vsel %vm1531, %v1528, %v1372
        %v1533 = vsel %vm1531, %v1529, %v1374
        %v1534 = vsel %vm1531, %v1530, %v1376
        %vm1535 = vcmask 64512
        %v1536 = vsel %vm1535, %v1532, %v1384
        %v1537 = vsel %vm1535, %v1533, %v1386
        %v1538 = vsel %vm1535, %v1534, %v1388
        %vm1539 = vcmask 80896
        %v1540 = vsel %vm1539, %v1536, %v1396
        %v1541 = vsel %vm1539, %v1537, %v1398
        %v1542 = vsel %vm1539, %v1538, %v1400
        %vm1543 = vcmask 97280
        %v1544 = vsel %vm1543, %v1540, %v1408
        %v1545 = vsel %vm1543, %v1541, %v1410
        %v1546 = vsel %vm1543, %v1542, %v1412
        %vm1547 = vcmask 113664
        %v1548 = vsel %vm1547, %v1544, %v1420
        %v1549 = vsel %vm1547, %v1545, %v1422
        %v1550 = vsel %vm1547, %v1546, %v1424
        %vm1551 = vcmask 130048
        %v1552 = vsel %vm1551, %v1548, %v1432
        %v1553 = vsel %vm1551, %v1549, %v1434
        %v1554 = vsel %vm1551, %v1550, %v1436
        %vm1555 = vcmask 146432
        %v1556 = vsel %vm1555, %v1552, %v1444
        %v1557 = vsel %vm1555, %v1553, %v1446
        %v1558 = vsel %vm1555, %v1554, %v1448
        %vm1559 = vcmask 162816
        %v1560 = vsel %vm1559, %v1556, %v1456
        %v1561 = vsel %vm1559, %v1557, %v1458
        %v1562 = vsel %vm1559, %v1558, %v1460
        %vm1563 = vcmask 179200
        %v1564 = vsel %vm1563, %v1560, %v1468
        %v1565 = vsel %vm1563, %v1561, %v1470
        %v1566 = vsel %vm1563, %v1562, %v1472
        %vm1567 = vcmask 195584
        %v1568 = vsel %vm1567, %v1564, %v1480
        %v1569 = vsel %vm1567, %v1565, %v1482
        %v1570 = vsel %vm1567, %v1566, %v1484
        %vm1571 = vcmask 211968
        %v1572 = vsel %vm1571, %v1568, %v1492
        %v1573 = vsel %vm1571, %v1569, %v1494
        %v1574 = vsel %vm1571, %v1570, %v1496
        %vm1575 = vcmask 228352
        %v1576 = vsel %vm1575, %v1572, %v1504
        %v1577 = vsel %vm1575, %v1573, %v1506
        %v1578 = vsel %vm1575, %v1574, %v1508
        %vm1579 = vcmask 244736
        %v1580 = vsel %vm1579, %v1576, %v1516
        %v1581 = vsel %vm1579, %v1577, %v1518
        %v1582 = vsel %vm1579, %v1578, %v1520
        %v1583 = vld [vmem:[%s2] sm:$0xff]
        %1587 = vrot.lane.b32.xlu0 %v1580, 1
        %v1588 = vpop.permute.xlu0 %1587
        %1589 = vrot.lane.b32.xlu0 %v1581, 1
        %v1590 = vpop.permute.xlu0 %1589
        %1591 = vrot.lane.b32.xlu0 %v1582, 1
        %v1592 = vpop.permute.xlu0 %1591
        %vm1596 = vcmask 7168
        %v1597 = vsel %vm1596, 0.0, %v1588
        %v1598 = vsel %vm1596, 0.0, %v1590
        %v1599 = vsel %vm1596, 0.0, %v1592
        %vm1600 = vcmask 269312
        %v1601 = vsel %vm1600, %v1597, 0.0
        %v1602 = vsel %vm1600, %v1598, 0.0
        %v1603 = vsel %vm1600, %v1599, 0.0
        %1605 = vrot.lane.b32.xlu0 %v1602, 127
        %v1606 = vpop.permute.xlu0 %1605
        %v1608 = vadd.f32 %v1601, %v1606
        %1610 = vrot.lane.b32.xlu0 %v1603, 126
        %v1611 = vpop.permute.xlu0 %1610
        %v1613 = vadd.f32 %v1608, %v1611
        %1615 = vset.pattern.permute.xlu0 0
        %1616 = vperm.xlu0 %1615, %v1583
        %v1617 = vpop.permute.xlu0 %1616
        %v1619 = vadd.f32 %v1613, %v1617
        %v1620 = vmax.f32 %v1619, 0.0
        %vm1621 = vcmask 261120
        %1622 = vst.msk [vmem:[%s161] sm:$0xff] %vm1621, %v1620
        %s1623 = sand.u32 %s93, 1
        %s1624 = scalar_lea.sflag [#allocation3], %s1623
        %s1625 = sand.u32 %s93, 1
        %s1626 = smul.addr %s1625, 8
        %s1627 = scalar_lea.vmem [#allocation2], %s1626
        // Predicated region
        $region33: #{upsample_cnn_forward.1} parent=31 // pred_check
          %p1628 = pneg %p103
        $region34: #{upsample_cnn_forward.1} parent=31 // pred_check_branch
          %1630 = sbr.rel (%p1628) target = $region36
        $region35: #{upsample_cnn_forward.1} parent=31 // pred_region
          %s1632 = ssub.s32 128, 128
          %1633 = vsyncadd %s1624, %s1632
          %s1634 = smul.addr %s17, 128
          %s1635 = scalar_lea.hbm %s3, %s1634
          %s1637 = sshll.u32 %s1627, 4
          %s1638 = int_to_ptr.vmem [resolvable:$true] %s1637
          %1640 = dma.vmem_to_hbm [thread:$0]  %s1638, 128, %s1635, %s1624
        $region36: #{upsample_cnn_forward.1} parent=31 // pred_fallthru
          _
      $region32: #{upsample_cnn_forward.1} parent=5 // pred_fallthru
        _
      %p1641 = scmp.le.s32.totalorder 2, %s12
      // Predicated region
      $region37: #{upsample_cnn_forward.1} parent=5 // pred_check
        %p1642 = pneg %p1641
      $region38: #{upsample_cnn_forward.1} parent=5 // pred_check_branch
        %1644 = sbr.rel (%p1642) target = $region40
      $region39: #{upsample_cnn_forward.1} parent=5 // pred_region
        %s1645 = ssub.s32 %s12, 2
        // Predicated region
        $region41: #{upsample_cnn_forward.1} parent=39 // pred_check
          %p1646 = pneg %p109
        $region42: #{upsample_cnn_forward.1} parent=39 // pred_check_branch
          %1648 = sbr.rel (%p1646) target = $region44
        $region43: #{upsample_cnn_forward.1} parent=39 // pred_region
          %s1649 = sand.u32 %s94, 1
          %s1650 = scalar_lea.sflag [#allocation3], %s1649
          %s1651 = sand.u32 %s94, 1
          %s1652 = smul.addr %s1651, 8
          %s1653 = scalar_lea.vmem [#allocation2], %s1652
          %1654 = dma.done %s1650, 128
        $region44: #{upsample_cnn_forward.1} parent=39 // pred_fallthru
          _
      $region40: #{upsample_cnn_forward.1} parent=5 // pred_fallthru
        _
    $region6: #{upsample_cnn_forward.1} parent=1 // loop_footer
      %s16 = sadd.s32 1, %s12
    $region7: #{upsample_cnn_forward.1} parent=1 // loop_footer_branch
      %11 = sbr.rel target = $region3
    $region8: #{upsample_cnn_forward.1} parent=1 // loop_exit
      _
    %1655 = vsyncpa [#allocation3], 1
    %s1656 = scalar_lea.sflag [#allocation3], 1
    %1657 = vsyncpa %s1656, 1

</llo_original>
